<compile_context>
chip_gen: v6e
topology: v6e:2x2x1
jax: 0.10.0
libtpu: 0.0.40
codegen_flags: <defaults>
</compile_context>

<pallas_src>
import math

import jax
import jax.numpy as jnp
import numpy as np
from jax.experimental import pallas as pl
from jax.experimental.pallas import tpu as pltpu


def _round_up(v, m):
    return ((v + m - 1) // m) * m


def bbb_linear_fcprobforward(x, mu_weight, sigma_weight, eps_weight, q_logvar_init,
                             *, tile_m=None, tile_n=256, tile_k=512):
    """Returns (out, kl) exactly like BBBLinearFactorial.fcprobforward."""
    batch, in_features = x.shape
    out_features, in_f2 = mu_weight.shape
    assert in_f2 == in_features

    log_q = math.log(q_logvar_init)
    inv_2q2 = 1.0 / (2.0 * q_logvar_init * q_logvar_init)
    kl_const = log_q - 0.5                       # fold log(q) - 1/2 once

    # ---- tile sizes: lane dims multiples of 128, sublane dims multiples of 8.
    if tile_m is None:
        tile_m = min(128, _round_up(batch, 8))
    tm = _round_up(tile_m, 8)
    tn = min(_round_up(tile_n, 128), _round_up(out_features, 128))
    tk = min(_round_up(tile_k, 128), _round_up(in_features, 128))

    Mp = _round_up(batch, tm)
    Np = _round_up(out_features, tn)
    Kp = _round_up(in_features, tk)
    grid_n, grid_m, grid_k = Np // tn, Mp // tm, Kp // tk

    # ---- pad (+ transpose params to (K, N)).  Padding choice: mu=0, eps=0,
    #      sigma=log(q)  =>  padded weight == 0 and padded KL element == 0.
    # NOTE: in a real model, store the params pre-transposed as (in, out) to
    # avoid these wrapper-side transposes entirely.
    xp = jnp.pad(x, ((0, Mp - batch), (0, Kp - in_features)))
    wpad = ((0, Kp - in_features), (0, Np - out_features))
    mu_t = jnp.pad(mu_weight.T, wpad)
    eps_t = jnp.pad(eps_weight.T, wpad)
    sg_t = jnp.pad(sigma_weight.T, wpad, constant_values=log_q)

    def kernel(x_ref, mu_ref, sg_ref, ep_ref, out_ref, kl_ref, acc_ref):
        # grid axes: 0 = n (out tiles, parallel), 1 = m (batch tiles), 2 = k.
        m = pl.program_id(1)
        k = pl.program_id(2)

        @pl.when(k == 0)
        def _():
            acc_ref[...] = jnp.zeros_like(acc_ref)

        @pl.when((m == 0) & (k == 0))
        def _():
            kl_ref[...] = jnp.zeros_like(kl_ref)

        mu = mu_ref[...]
        sigma = sg_ref[...]
        sig_w = jnp.exp(sigma)                    # EUP
        weight = mu + sig_w * ep_ref[...]         # VPU; (tk, tn)

        # x (tm, tk) @ W (tk, tn) -> MXU, f32 accumulate.
        acc_ref[...] += jnp.dot(x_ref[...], weight,
                                preferred_element_type=jnp.float32)

        # KL over this weight tile — counted once (only at m == 0), reuses sig_w.
        @pl.when(m == 0)
        def _():
            kl_elem = (kl_const - sigma) + (sig_w * sig_w + mu * mu) * inv_2q2
            col = jnp.sum(kl_elem, axis=0, keepdims=True)       # (1, tn) XLU
            part = col[:, 0:128]
            for j in range(1, tn // 128):                        # fold lanes
                part = part + col[:, j * 128:(j + 1) * 128]
            kl_ref[...] = kl_ref[...] + part.reshape(1, 1, 128)

        @pl.when(k == pl.num_programs(2) - 1)
        def _():
            out_ref[...] = acc_ref[...].astype(out_ref.dtype)

    grid_spec = pltpu.PrefetchScalarGridSpec(
        num_scalar_prefetch=0,
        grid=(grid_n, grid_m, grid_k),
        in_specs=[
            pl.BlockSpec((tm, tk), lambda n, m, k: (m, k)),   # x
            pl.BlockSpec((tk, tn), lambda n, m, k: (k, n)),   # mu   (K, N)
            pl.BlockSpec((tk, tn), lambda n, m, k: (k, n)),   # sigma(K, N)
            pl.BlockSpec((tk, tn), lambda n, m, k: (k, n)),   # eps  (K, N)
        ],
        out_specs=[
            pl.BlockSpec((tm, tn), lambda n, m, k: (m, n)),          # out
            pl.BlockSpec((1, 1, 128), lambda n, m, k: (n, 0, 0)),    # kl partials
        ],
        scratch_shapes=[pltpu.VMEM((tm, tn), jnp.float32)],
    )

    out_p, kl_partial = pl.pallas_call(
        kernel,
        grid_spec=grid_spec,
        out_shape=(
            jax.ShapeDtypeStruct((Mp, Np), x.dtype),
            jax.ShapeDtypeStruct((grid_n, 1, 128), jnp.float32),
        ),
        compiler_params=pltpu.CompilerParams(
            dimension_semantics=("parallel", "arbitrary", "arbitrary"),
        ),
        cost_estimate=pl.CostEstimate(
            flops=2 * Mp * Np * Kp,
            transcendentals=Kp * Np,
            bytes_accessed=4 * (Mp * Kp + 3 * Kp * Np + Mp * Np + grid_n * 128),
        ),
    )(xp, mu_t, sg_t, eps_t)

    out = out_p[:batch, :out_features]
    kl = jnp.sum(kl_partial)                     # padded elements contribute 0
    return out, kl


if __name__ == "__main__":
    # Small shapes that still exercise the (N, M, K) grid (2 x 3 x 3 tiles with
    # the tile sizes below) plus the padding path (out_features not a multiple
    # of 128).
    batch = 24
    in_features = 384
    out_features = 200

    q_logvar_init = 0.05    # must be > 0 (log is taken)
    p_logvar_init = -3.0    # sigma_weight initial fill value

    key = jax.random.PRNGKey(0)
    k_x, k_mu, k_eps = jax.random.split(key, 3)

    # Deterministic parameter init mirroring reset_parameters():
    stdv = 1.0 / math.sqrt(in_features)
    mu_weight = jax.random.uniform(
        k_mu, (out_features, in_features), jnp.float32, minval=-stdv, maxval=stdv)
    sigma_weight = jnp.full((out_features, in_features), p_logvar_init, jnp.float32)
    # eps_weight.normal_() — the per-call standard-normal sample (JAX glue).
    eps_weight = jax.random.normal(k_eps, (out_features, in_features), jnp.float32)

    x = jax.random.normal(k_x, (batch, in_features), jnp.float32)

    out, kl = bbb_linear_fcprobforward(
        x, mu_weight, sigma_weight, eps_weight, q_logvar_init,
        tile_m=8, tile_n=128, tile_k=128)
    out = jax.block_until_ready(out)
    kl = jax.block_until_ready(kl)

    # High-precision host reference of the same math.
    x64 = np.asarray(x, dtype=np.float64)
    mu64 = np.asarray(mu_weight, dtype=np.float64)
    sg64 = np.asarray(sigma_weight, dtype=np.float64)
    ep64 = np.asarray(eps_weight, dtype=np.float64)
    sig64 = np.exp(sg64)
    w64 = mu64 + sig64 * ep64
    out_ref = x64 @ w64.T
    kl_ref = np.sum(
        math.log(q_logvar_init) - sg64
        + (sig64 ** 2 + mu64 ** 2) / (2.0 * q_logvar_init ** 2) - 0.5)

    assert out.shape == (batch, out_features), "out shape mismatch"
    assert np.allclose(np.asarray(out, np.float64), out_ref,
                       atol=1e-3, rtol=1e-3), "out mismatch"
    assert np.allclose(float(kl), kl_ref, rtol=5e-4), "kl mismatch"

    print("KERNEL_OK")
</pallas_src>

<mosaic_0001>
module attributes {stable_mosaic.version = 11 : i64} {
  func.func @kernel(%arg0: i32, %arg1: i32, %arg2: i32, %arg3: memref<8x128xf32, #tpu.memory_space<vmem>>, %arg4: memref<128x128xf32, #tpu.memory_space<vmem>>, %arg5: memref<128x128xf32, #tpu.memory_space<vmem>>, %arg6: memref<128x128xf32, #tpu.memory_space<vmem>>, %arg7: memref<8x128xf32, #tpu.memory_space<vmem>>, %arg8: memref<1x1x128xf32, #tpu.memory_space<vmem>>, %arg9: memref<8x128xf32, #tpu.memory_space<vmem>>) attributes {dimension_semantics = [#tpu.dimension_semantics<parallel>, #tpu.dimension_semantics<arbitrary>, #tpu.dimension_semantics<arbitrary>], iteration_bounds = array<i64: 2, 3, 3>, scalar_prefetch = 0 : i64, scratch_operands = 1 : i64, tpu.core_type = #tpu.core_type<tc>, window_params = [{transform_indices = @transform_0, window_bounds = array<i64: 8, 128>}, {transform_indices = @transform_1, window_bounds = array<i64: 128, 128>}, {transform_indices = @transform_2, window_bounds = array<i64: 128, 128>}, {transform_indices = @transform_3, window_bounds = array<i64: 128, 128>}, {transform_indices = @transform_4, window_bounds = array<i64: 8, 128>}, {transform_indices = @transform_5, window_bounds = array<i64: 1, 1, 128>}]} {
    %c0_i32 = arith.constant 0 : i32
    %0 = arith.cmpi eq, %arg2, %c0_i32 : i32
    %1 = arith.extui %0 : i1 to i32
    %c0_i32_0 = arith.constant 0 : i32
    %2 = arith.cmpi ne, %1, %c0_i32_0 : i32
    scf.if %2 {
      %cst_18 = arith.constant 0.000000e+00 : f32
      %25 = vector.broadcast %cst_18 : f32 to vector<8x128xf32>
      %c0_19 = arith.constant 0 : index
      %c0_20 = arith.constant 0 : index
      %26 = vector.load %arg9[%c0_19, %c0_20] : memref<8x128xf32, #tpu.memory_space<vmem>>, vector<8x128xf32>
      tpu.vector_store %arg9[%c0_19, %c0_20], %25 {strides = array<i32>} : memref<8x128xf32, #tpu.memory_space<vmem>>, vector<8x128xf32>,
    } else {
    }
    %c0_i32_1 = arith.constant 0 : i32
    %3 = arith.cmpi eq, %arg1, %c0_i32_1 : i32
    %c0_i32_2 = arith.constant 0 : i32
    %4 = arith.cmpi eq, %arg2, %c0_i32_2 : i32
    %5 = arith.andi %3, %4 : i1
    %6 = arith.extui %5 : i1 to i32
    %c0_i32_3 = arith.constant 0 : i32
    %7 = arith.cmpi ne, %6, %c0_i32_3 : i32
    scf.if %7 {
      %cst_18 = arith.constant 0.000000e+00 : f32
      %25 = vector.broadcast %cst_18 : f32 to vector<1x1x128xf32>
      %c0_19 = arith.constant 0 : index
      %c0_20 = arith.constant 0 : index
      %c0_21 = arith.constant 0 : index
      %26 = vector.load %arg8[%c0_19, %c0_20, %c0_21] : memref<1x1x128xf32, #tpu.memory_space<vmem>>, vector<1x1x128xf32>
      tpu.vector_store %arg8[%c0_19, %c0_20, %c0_21], %25 {strides = array<i32>} : memref<1x1x128xf32, #tpu.memory_space<vmem>>, vector<1x1x128xf32>,
    } else {
    }
    %c0 = arith.constant 0 : index
    %c0_4 = arith.constant 0 : index
    %8 = vector.load %arg4[%c0, %c0_4] : memref<128x128xf32, #tpu.memory_space<vmem>>, vector<128x128xf32>
    %c0_5 = arith.constant 0 : index
    %c0_6 = arith.constant 0 : index
    %9 = vector.load %arg5[%c0_5, %c0_6] : memref<128x128xf32, #tpu.memory_space<vmem>>, vector<128x128xf32>
    %10 = math.exp %9 : vector<128x128xf32>
    %c0_7 = arith.constant 0 : index
    %c0_8 = arith.constant 0 : index
    %11 = vector.load %arg6[%c0_7, %c0_8] : memref<128x128xf32, #tpu.memory_space<vmem>>, vector<128x128xf32>
    %12 = arith.mulf %10, %11 : vector<128x128xf32>
    %13 = arith.addf %8, %12 : vector<128x128xf32>
    %c0_9 = arith.constant 0 : index
    %c0_10 = arith.constant 0 : index
    %14 = vector.load %arg9[%c0_9, %c0_10] : memref<8x128xf32, #tpu.memory_space<vmem>>, vector<8x128xf32>
    %c0_11 = arith.constant 0 : index
    %c0_12 = arith.constant 0 : index
    %15 = vector.load %arg3[%c0_11, %c0_12] : memref<8x128xf32, #tpu.memory_space<vmem>>, vector<8x128xf32>
    %cst = arith.constant dense<0.000000e+00> : vector<8x128xf32>
    %16 = tpu.matmul %15, %13, %cst {dimension_numbers = #tpu.dot_dimension_numbers<[1], [0], [0], [1], [0, 0, 1, 1], [], []>} : vector<8x128xf32>, vector<128x128xf32>, vector<8x128xf32> -> vector<8x128xf32>
    %17 = arith.addf %14, %16 : vector<8x128xf32>
    %c0_13 = arith.constant 0 : index
    %c0_14 = arith.constant 0 : index
    %18 = vector.load %arg9[%c0_13, %c0_14] : memref<8x128xf32, #tpu.memory_space<vmem>>, vector<8x128xf32>
    tpu.vector_store %arg9[%c0_13, %c0_14], %17 {strides = array<i32>} : memref<8x128xf32, #tpu.memory_space<vmem>>, vector<8x128xf32>,
    %c0_i32_15 = arith.constant 0 : i32
    %19 = arith.cmpi eq, %arg1, %c0_i32_15 : i32
    %20 = arith.extui %19 : i1 to i32
    %c0_i32_16 = arith.constant 0 : i32
    %21 = arith.cmpi ne, %20, %c0_i32_16 : i32
    scf.if %21 {
      %cst_18 = arith.constant -3.49573231 : f32
      %25 = vector.broadcast %cst_18 : f32 to vector<128x128xf32>
      %26 = arith.subf %25, %9 : vector<128x128xf32>
      %27 = arith.mulf %10, %10 : vector<128x128xf32>
      %28 = arith.mulf %8, %8 : vector<128x128xf32>
      %29 = arith.addf %27, %28 : vector<128x128xf32>
      %cst_19 = arith.constant 2.000000e+02 : f32
      %30 = vector.broadcast %cst_19 : f32 to vector<128x128xf32>
      %31 = arith.mulf %29, %30 : vector<128x128xf32>
      %32 = arith.addf %26, %31 : vector<128x128xf32>
      %cst_20 = arith.constant dense<0.000000e+00> : vector<128xf32>
      %33 = vector.multi_reduction <add>, %32, %cst_20 [0] : vector<128x128xf32> to vector<128xf32>
      %34 = vector.shape_cast %33 : vector<128xf32> to vector<1x128xf32>
      %c0_21 = arith.constant 0 : index
      %c0_22 = arith.constant 0 : index
      %c0_23 = arith.constant 0 : index
      %35 = vector.load %arg8[%c0_21, %c0_22, %c0_23] : memref<1x1x128xf32, #tpu.memory_space<vmem>>, vector<1x1x128xf32>
      %36 = vector.shape_cast %34 : vector<1x128xf32> to vector<1x1x128xf32>
      %37 = arith.addf %35, %36 : vector<1x1x128xf32>
      %c0_24 = arith.constant 0 : index
      %c0_25 = arith.constant 0 : index
      %c0_26 = arith.constant 0 : index
      %38 = vector.load %arg8[%c0_24, %c0_25, %c0_26] : memref<1x1x128xf32, #tpu.memory_space<vmem>>, vector<1x1x128xf32>
      tpu.vector_store %arg8[%c0_24, %c0_25, %c0_26], %37 {strides = array<i32>} : memref<1x1x128xf32, #tpu.memory_space<vmem>>, vector<1x1x128xf32>,
    } else {
    }
    %c2_i32 = arith.constant 2 : i32
    %22 = arith.cmpi eq, %arg2, %c2_i32 : i32
    %23 = arith.extui %22 : i1 to i32
    %c0_i32_17 = arith.constant 0 : i32
    %24 = arith.cmpi ne, %23, %c0_i32_17 : i32
    scf.if %24 {
      %c0_18 = arith.constant 0 : index
      %c0_19 = arith.constant 0 : index
      %25 = vector.load %arg9[%c0_18, %c0_19] : memref<8x128xf32, #tpu.memory_space<vmem>>, vector<8x128xf32>
      %c0_20 = arith.constant 0 : index
      %c0_21 = arith.constant 0 : index
      %26 = vector.load %arg7[%c0_20, %c0_21] : memref<8x128xf32, #tpu.memory_space<vmem>>, vector<8x128xf32>
      tpu.vector_store %arg7[%c0_20, %c0_21], %25 {strides = array<i32>} : memref<8x128xf32, #tpu.memory_space<vmem>>, vector<8x128xf32>,
    } else {
    }
    return
  }
  func.func @transform_0(%arg0: i32, %arg1: i32, %arg2: i32) -> (i32, i32) {
    %c0_i32 = arith.constant 0 : i32
    return %arg1, %arg2 : i32, i32
  }
  func.func @transform_1(%arg0: i32, %arg1: i32, %arg2: i32) -> (i32, i32) {
    %c0_i32 = arith.constant 0 : i32
    return %arg2, %arg0 : i32, i32
  }
  func.func @transform_2(%arg0: i32, %arg1: i32, %arg2: i32) -> (i32, i32) {
    %c0_i32 = arith.constant 0 : i32
    return %arg2, %arg0 : i32, i32
  }
  func.func @transform_3(%arg0: i32, %arg1: i32, %arg2: i32) -> (i32, i32) {
    %c0_i32 = arith.constant 0 : i32
    return %arg2, %arg0 : i32, i32
  }
  func.func @transform_4(%arg0: i32, %arg1: i32, %arg2: i32) -> (i32, i32) {
    %c0_i32 = arith.constant 0 : i32
    return %arg1, %arg0 : i32, i32
  }
  func.func @transform_5(%arg0: i32, %arg1: i32, %arg2: i32) -> (i32, i32, i32) {
    %c0_i32 = arith.constant 0 : i32
    %c0_i32_0 = arith.constant 0 : i32
    %c0_i32_1 = arith.constant 0 : i32
    return %arg0, %c0_i32, %c0_i32_0 : i32, i32, i32
  }
}

</mosaic_0001>

<llo_original>
// kernel: tpu_custom_call.1
$region0: #{tpu_custom_call.1}
  #allocation0 [shape = 'u32[]', space=smem, size = 0x4, offset = 0x4, fixed_abs, tag = 'smem constant byte address 0x4 - core index']
  #allocation1 [shape = 'u32[144,128]{1,0:T(1,128)}', space=vmem, size = 0x12000, scoped, tag = 'internal scratch']
  #allocation2 [shape = 'f32[8,128]{1,0:T(8,128)}', space=vmem, size = 0x1000, scoped, tag = 'scratch operand']
  %s0 = inlined_call_operand.hbm [shape: f32[24,384], index: 0, kind: input, shape index: {}]
  %s1 = inlined_call_operand.hbm [shape: f32[384,256], index: 1, kind: input, shape index: {}]
  %s2 = inlined_call_operand.hbm [shape: f32[384,256], index: 2, kind: input, shape index: {}]
  %s3 = inlined_call_operand.hbm [shape: f32[384,256], index: 3, kind: input, shape index: {}]
  %s4 = inlined_call_operand.hbm [shape: f32[24,256], index: 4, kind: output, shape index: {0}]
  %s5 = inlined_call_operand.hbm [shape: f32[2,1,128], index: 5, kind: output, shape index: {1}]
  %6 = xla_tuple %s4, %s5
  %s7 = sld [smem:[#allocation0]]
  $region89: #{tpu_custom_call.1} parent=0
    _
  %s9 = ssub.s32 1, %s7
  %s10 = scalar_select 0, %s9, %s7
  $region1: #{tpu_custom_call.1} parent=0
    #allocation3 [shape = 'u8[8192]{0}', space=vmem, size = 0x2000, scoped, tag = 'input window, operand 0']
    #allocation4 [shape = 's32[2]{0}', space=sflag, size = 0x8, scoped, tag = 'scoped memory for tpu_custom_call.1']
    #allocation5 [shape = 's32[2]{0}', space=sflag, size = 0x8, scoped, tag = 'scoped memory for tpu_custom_call.1']
    #allocation6 [shape = 'u8[131072]{0}', space=vmem, size = 0x20000, scoped, tag = 'input window, operand 1']
    #allocation7 [shape = 's32[2]{0}', space=sflag, size = 0x8, scoped, tag = 'scoped memory for tpu_custom_call.1']
    #allocation8 [shape = 'u8[131072]{0}', space=vmem, size = 0x20000, scoped, tag = 'input window, operand 2']
    #allocation9 [shape = 'u8[131072]{0}', space=vmem, size = 0x20000, scoped, tag = 'input window, operand 3']
    #allocation10 [shape = 's32[2]{0}', space=sflag, size = 0x8, scoped, tag = 'scoped memory for tpu_custom_call.1']
    #allocation11 [shape = 'u8[8192]{0}', space=vmem, size = 0x2000, scoped, tag = 'output window, operand 0']
    #allocation12 [shape = 'u8[1024]{0}', space=vmem, size = 0x400, scoped, tag = 'output window, operand 1']
    #allocation13 [shape = 's32[2]{0}', space=sflag, size = 0x8, scoped, tag = 'scoped memory for tpu_custom_call.1']
    %11 = vsyncpa [#allocation4], 0
    %s12 = scalar_lea.sflag [#allocation4], 1
    %13 = vsyncpa %s12, 0
    %14 = vsyncpa [#allocation7], 0
    %s15 = scalar_lea.sflag [#allocation7], 1
    %16 = vsyncpa %s15, 0
    %17 = vsyncpa [#allocation10], 0
    %s18 = scalar_lea.sflag [#allocation10], 1
    %19 = vsyncpa %s18, 0
    %20 = vsyncpa [#allocation5], 0
    %s21 = scalar_lea.sflag [#allocation5], 1
    %22 = vsyncpa %s21, 0
    %23 = vsyncpa [#allocation13], 0
    %s24 = scalar_lea.sflag [#allocation13], 1
    %25 = vsyncpa %s24, 0
    loop: start=0, step=1, limit=20
    $region2: #{tpu_custom_call.1} parent=1 // loop_pre_header
      _
    $region3: #{tpu_custom_call.1} parent=1 // loop_header
      %s27 = sphi 0, %s31
      %p28 = scmp.ge.s32.totalorder %s27, 20
      %s34 = sphi 0, %s53
      %s35 = sphi 0, %s49
      %s36 = sphi 0, %s45
      %s37 = sphi 0, %s34
      %s38 = sphi 0, %s35
      %s39 = sphi 0, %s36
      %s40 = sphi 0, %s37
      %s41 = sphi 0, %s38
      %s42 = sphi 0, %s39
      %s58 = sphi 0, %s60
      %s61 = sphi 0, %s58
      %s62 = sphi 0, %s61
      %s78 = sphi 0, %s62
      %s86 = sphi 0, %s88
      %s89 = sphi 0, %s86
      %s90 = sphi 0, %s89
      %s106 = sphi 0, %s90
      %s114 = sphi 0, %s116
      %s117 = sphi 0, %s114
      %s118 = sphi 0, %s117
      %s134 = sphi 0, %s118
      %s142 = sphi 0, %s144
      %s145 = sphi 0, %s142
      %s146 = sphi 0, %s145
      %s162 = sphi 0, %s146
      %s170 = sphi 0, %s172
      %s173 = sphi 0, %s170
      %s174 = sphi 0, %s173
      %s190 = sphi 0, %s174
      %s196 = sphi 0, %s198
      %s199 = sphi 0, %s196
      %s200 = sphi 0, %s199
      %s216 = sphi 0, %s200
    $region4: #{tpu_custom_call.1} parent=1 // loop_header_branch
      %30 = sbr.rel (%p28) target = $region8
    $region5: #{tpu_custom_call.1} parent=1 // loop_body
      %s32 = ssub.s32 %s27, 1
      %s33 = ssub.s32 %s27, 2
      %s43 = sadd.s32 1, %s36
      %p44 = scmp.ge.s32.totalorder %s43, 3
      %s45 = scalar_select %p44, 0, %s43
      %s46 = sadd.s32 1, %s35
      %s47 = scalar_select %p44, %s46, %s35
      %p48 = scmp.ge.s32.totalorder %s47, 3
      %s49 = scalar_select %p48, 0, %s47
      %s50 = sadd.s32 1, %s34
      %s51 = scalar_select %p48, %s50, %s34
      %p52 = scmp.ge.s32.totalorder %s51, 2
      %s53 = scalar_select %p52, 0, %s51
      %s54 = ssub.s32 %s35, %s49
      %s55 = ssub.s32 %s36, %s45
      %s56 = sor.u32 %s54, %s55
      %p57 = scmp.eq.s32.totalorder %s56, 0
      %s59 = sadd.s32 %s58, 1
      %s60 = scalar_select %p57, %s58, %s59
      %p63 = pneg %p57
      %p64 = scmp.eq.s32.totalorder %s27, 17
      %p65 = por %p63, %p64
      %p66 = scmp.ne.s32.totalorder %s58, %s61
      %p67 = scmp.eq.s32.totalorder %s27, 0
      %p68 = por %p66, %p67
      %p69 = scmp.ne.s32.totalorder %s58, %s61
      %p70 = scmp.eq.s32.totalorder %s32, 17
      %p71 = por %p69, %p70
      %p72 = scmp.ne.s32.totalorder %s61, %s62
      %p73 = scmp.eq.s32.totalorder %s32, 0
      %p74 = por %p72, %p73
      %p75 = scmp.ne.s32.totalorder %s61, %s62
      %p76 = scmp.eq.s32.totalorder %s33, 17
      %p77 = por %p75, %p76
      %p79 = scmp.ne.s32.totalorder %s62, %s78
      %p80 = scmp.eq.s32.totalorder %s33, 0
      %p81 = por %p79, %p80
      %s82 = ssub.s32 %s36, %s45
      %s83 = ssub.s32 %s34, %s53
      %s84 = sor.u32 %s82, %s83
      %p85 = scmp.eq.s32.totalorder %s84, 0
      %s87 = sadd.s32 %s86, 1
      %s88 = scalar_select %p85, %s86, %s87
      %p91 = pneg %p85
      %p92 = scmp.eq.s32.totalorder %s27, 17
      %p93 = por %p91, %p92
      %p94 = scmp.ne.s32.totalorder %s86, %s89
      %p95 = scmp.eq.s32.totalorder %s27, 0
      %p96 = por %p94, %p95
      %p97 = scmp.ne.s32.totalorder %s86, %s89
      %p98 = scmp.eq.s32.totalorder %s32, 17
      %p99 = por %p97, %p98
      %p100 = scmp.ne.s32.totalorder %s89, %s90
      %p101 = scmp.eq.s32.totalorder %s32, 0
      %p102 = por %p100, %p101
      %p103 = scmp.ne.s32.totalorder %s89, %s90
      %p104 = scmp.eq.s32.totalorder %s33, 17
      %p105 = por %p103, %p104
      %p107 = scmp.ne.s32.totalorder %s90, %s106
      %p108 = scmp.eq.s32.totalorder %s33, 0
      %p109 = por %p107, %p108
      %s110 = ssub.s32 %s36, %s45
      %s111 = ssub.s32 %s34, %s53
      %s112 = sor.u32 %s110, %s111
      %p113 = scmp.eq.s32.totalorder %s112, 0
      %s115 = sadd.s32 %s114, 1
      %s116 = scalar_select %p113, %s114, %s115
      %p119 = pneg %p113
      %p120 = scmp.eq.s32.totalorder %s27, 17
      %p121 = por %p119, %p120
      %p122 = scmp.ne.s32.totalorder %s114, %s117
      %p123 = scmp.eq.s32.totalorder %s27, 0
      %p124 = por %p122, %p123
      %p125 = scmp.ne.s32.totalorder %s114, %s117
      %p126 = scmp.eq.s32.totalorder %s32, 17
      %p127 = por %p125, %p126
      %p128 = scmp.ne.s32.totalorder %s117, %s118
      %p129 = scmp.eq.s32.totalorder %s32, 0
      %p130 = por %p128, %p129
      %p131 = scmp.ne.s32.totalorder %s117, %s118
      %p132 = scmp.eq.s32.totalorder %s33, 17
      %p133 = por %p131, %p132
      %p135 = scmp.ne.s32.totalorder %s118, %s134
      %p136 = scmp.eq.s32.totalorder %s33, 0
      %p137 = por %p135, %p136
      %s138 = ssub.s32 %s36, %s45
      %s139 = ssub.s32 %s34, %s53
      %s140 = sor.u32 %s138, %s139
      %p141 = scmp.eq.s32.totalorder %s140, 0
      %s143 = sadd.s32 %s142, 1
      %s144 = scalar_select %p141, %s142, %s143
      %p147 = pneg %p141
      %p148 = scmp.eq.s32.totalorder %s27, 17
      %p149 = por %p147, %p148
      %p150 = scmp.ne.s32.totalorder %s142, %s145
      %p151 = scmp.eq.s32.totalorder %s27, 0
      %p152 = por %p150, %p151
      %p153 = scmp.ne.s32.totalorder %s142, %s145
      %p154 = scmp.eq.s32.totalorder %s32, 17
      %p155 = por %p153, %p154
      %p156 = scmp.ne.s32.totalorder %s145, %s146
      %p157 = scmp.eq.s32.totalorder %s32, 0
      %p158 = por %p156, %p157
      %p159 = scmp.ne.s32.totalorder %s145, %s146
      %p160 = scmp.eq.s32.totalorder %s33, 17
      %p161 = por %p159, %p160
      %p163 = scmp.ne.s32.totalorder %s146, %s162
      %p164 = scmp.eq.s32.totalorder %s33, 0
      %p165 = por %p163, %p164
      %s166 = ssub.s32 %s35, %s49
      %s167 = ssub.s32 %s34, %s53
      %s168 = sor.u32 %s166, %s167
      %p169 = scmp.eq.s32.totalorder %s168, 0
      %s171 = sadd.s32 %s170, 1
      %s172 = scalar_select %p169, %s170, %s171
      %p175 = pneg %p169
      %p176 = scmp.eq.s32.totalorder %s27, 17
      %p177 = por %p175, %p176
      %p178 = scmp.ne.s32.totalorder %s170, %s173
      %p179 = scmp.eq.s32.totalorder %s27, 0
      %p180 = por %p178, %p179
      %p181 = scmp.ne.s32.totalorder %s170, %s173
      %p182 = scmp.eq.s32.totalorder %s32, 17
      %p183 = por %p181, %p182
      %p184 = scmp.ne.s32.totalorder %s173, %s174
      %p185 = scmp.eq.s32.totalorder %s32, 0
      %p186 = por %p184, %p185
      %p187 = scmp.ne.s32.totalorder %s173, %s174
      %p188 = scmp.eq.s32.totalorder %s33, 17
      %p189 = por %p187, %p188
      %p191 = scmp.ne.s32.totalorder %s174, %s190
      %p192 = scmp.eq.s32.totalorder %s33, 0
      %p193 = por %p191, %p192
      %s194 = ssub.s32 %s34, %s53
      %p195 = scmp.eq.s32.totalorder %s194, 0
      %s197 = sadd.s32 %s196, 1
      %s198 = scalar_select %p195, %s196, %s197
      %p201 = pneg %p195
      %p202 = scmp.eq.s32.totalorder %s27, 17
      %p203 = por %p201, %p202
      %p204 = scmp.ne.s32.totalorder %s196, %s199
      %p205 = scmp.eq.s32.totalorder %s27, 0
      %p206 = por %p204, %p205
      %p207 = scmp.ne.s32.totalorder %s196, %s199
      %p208 = scmp.eq.s32.totalorder %s32, 17
      %p209 = por %p207, %p208
      %p210 = scmp.ne.s32.totalorder %s199, %s200
      %p211 = scmp.eq.s32.totalorder %s32, 0
      %p212 = por %p210, %p211
      %p213 = scmp.ne.s32.totalorder %s199, %s200
      %p214 = scmp.eq.s32.totalorder %s33, 17
      %p215 = por %p213, %p214
      %p217 = scmp.ne.s32.totalorder %s200, %s216
      %p218 = scmp.eq.s32.totalorder %s33, 0
      %p219 = por %p217, %p218
      %p220 = scmp.le.s32.totalorder 1, %s27
      %p221 = scmp.lt.s32.totalorder %s27, 19
      %p222 = pnand %p220, %p221
      %p223 = pneg %p222
      // Predicated region
      $region9: #{tpu_custom_call.1} parent=5 // pred_check
        _
      $region10: #{tpu_custom_call.1} parent=5 // pred_check_branch
        %225 = sbr.rel (%p222) target = $region12
      $region11: #{tpu_custom_call.1} parent=5 // pred_region
        %s226 = ssub.s32 %s27, 1
      $region12: #{tpu_custom_call.1} parent=5 // pred_fallthru
        _
      %p227 = scmp.lt.s32.totalorder %s27, 18
      // Predicated region
      $region13: #{tpu_custom_call.1} parent=5 // pred_check
        %p228 = pneg %p227
      $region14: #{tpu_custom_call.1} parent=5 // pred_check_branch
        %230 = sbr.rel (%p228) target = $region16
      $region15: #{tpu_custom_call.1} parent=5 // pred_region
        // Predicated region
        $region17: #{tpu_custom_call.1} parent=15 // pred_check
          %p231 = pneg %p68
        $region18: #{tpu_custom_call.1} parent=15 // pred_check_branch
          %233 = sbr.rel (%p231) target = $region20
        $region19: #{tpu_custom_call.1} parent=15 // pred_region
          %s234 = sand.u32 %s58, 1
          %s235 = scalar_lea.sflag [#allocation4], %s234
          %s236 = sand.u32 %s58, 1
          %s237 = smul.addr %s236, 8
          %s238 = scalar_lea.vmem [#allocation3], %s237
          %s240 = ssub.s32 128, 128
          %241 = vsyncadd %s235, %s240
          %s242 = smul.addr %s35, 3
          %s243 = sadd.s32 %s36, %s242
          %s244 = smul.addr %s243, 128
          %s245 = scalar_lea.hbm %s0, %s244
          %s247 = sshll.u32 %s238, 4
          %s248 = int_to_ptr.vmem [resolvable:$true] %s247
          %250 = dma.hbm_to_vmem [thread:$0]  %s245, 128, %s248, %s235
        $region20: #{tpu_custom_call.1} parent=15 // pred_fallthru
          _
        // Predicated region
        $region21: #{tpu_custom_call.1} parent=15 // pred_check
          %p251 = pneg %p96
        $region22: #{tpu_custom_call.1} parent=15 // pred_check_branch
          %253 = sbr.rel (%p251) target = $region24
        $region23: #{tpu_custom_call.1} parent=15 // pred_region
          %s254 = sand.u32 %s27, 1
          %s255 = scalar_lea.sflag [#allocation7], %s254
          %s256 = sand.u32 %s86, 1
          %s257 = smul.addr %s256, 128
          %s258 = scalar_lea.vmem [#allocation6], %s257
          %s259 = smul.u32 16, %s36
          %s261 = ssub.s32 2048, 2048
          %262 = vsyncadd %s255, %s261
          %s263 = smul.addr %s259, 2
          %s264 = sadd.s32 %s34, %s263
          %s265 = smul.addr %s264, 128
          %s266 = scalar_lea.hbm %s1, %s265
          %s267 = sshll.u32 %s258, 4
          %s268 = int_to_ptr.vmem [resolvable:$true] %s267
          %273 = dma.hbm_to_vmem [thread:$0]  %s266, 2048, %s268, %s255, 256, 128, 8
        $region24: #{tpu_custom_call.1} parent=15 // pred_fallthru
          _
        // Predicated region
        $region25: #{tpu_custom_call.1} parent=15 // pred_check
          %p274 = pneg %p124
        $region26: #{tpu_custom_call.1} parent=15 // pred_check_branch
          %276 = sbr.rel (%p274) target = $region28
        $region27: #{tpu_custom_call.1} parent=15 // pred_region
          %s277 = sand.u32 %s27, 1
          %s278 = scalar_lea.sflag [#allocation7], %s277
          %s279 = sand.u32 %s114, 1
          %s280 = smul.addr %s279, 128
          %s281 = scalar_lea.vmem [#allocation8], %s280
          %s282 = smul.u32 16, %s36
          %s284 = ssub.s32 2048, 2048
          %285 = vsyncadd %s278, %s284
          %s286 = smul.addr %s282, 2
          %s287 = sadd.s32 %s34, %s286
          %s288 = smul.addr %s287, 128
          %s289 = scalar_lea.hbm %s2, %s288
          %s290 = sshll.u32 %s281, 4
          %s291 = int_to_ptr.vmem [resolvable:$true] %s290
          %296 = dma.hbm_to_vmem [thread:$0]  %s289, 2048, %s291, %s278, 256, 128, 8
        $region28: #{tpu_custom_call.1} parent=15 // pred_fallthru
          _
        // Predicated region
        $region29: #{tpu_custom_call.1} parent=15 // pred_check
          %p297 = pneg %p152
        $region30: #{tpu_custom_call.1} parent=15 // pred_check_branch
          %299 = sbr.rel (%p297) target = $region32
        $region31: #{tpu_custom_call.1} parent=15 // pred_region
          %s300 = sand.u32 %s142, 1
          %s301 = scalar_lea.sflag [#allocation10], %s300
          %s302 = sand.u32 %s142, 1
          %s303 = smul.addr %s302, 128
          %s304 = scalar_lea.vmem [#allocation9], %s303
          %s305 = smul.u32 16, %s36
          %s307 = ssub.s32 2048, 2048
          %308 = vsyncadd %s301, %s307
          %s309 = smul.addr %s305, 2
          %s310 = sadd.s32 %s34, %s309
          %s311 = smul.addr %s310, 128
          %s312 = scalar_lea.hbm %s3, %s311
          %s313 = sshll.u32 %s304, 4
          %s314 = int_to_ptr.vmem [resolvable:$true] %s313
          %319 = dma.hbm_to_vmem [thread:$0]  %s312, 2048, %s314, %s301, 256, 128, 8
        $region32: #{tpu_custom_call.1} parent=15 // pred_fallthru
          _
      $region16: #{tpu_custom_call.1} parent=5 // pred_fallthru
        _
      %p320 = scmp.le.s32.totalorder 1, %s27
      %p321 = scmp.lt.s32.totalorder %s27, 19
      %p322 = pnand %p320, %p321
      %p323 = pneg %p322
      // Predicated region
      $region33: #{tpu_custom_call.1} parent=5 // pred_check
        _
      $region34: #{tpu_custom_call.1} parent=5 // pred_check_branch
        %325 = sbr.rel (%p322) target = $region36
      $region35: #{tpu_custom_call.1} parent=5 // pred_region
        %s326 = ssub.s32 %s27, 1
        %s327 = sand.u32 %s61, 1
        %s328 = scalar_lea.sflag [#allocation4], %s327
        %s329 = sand.u32 %s61, 1
        %s330 = smul.addr %s329, 8
        %s331 = scalar_lea.vmem [#allocation3], %s330
        // Predicated region
        $region37: #{tpu_custom_call.1} parent=35 // pred_check
          %p332 = pneg %p74
        $region38: #{tpu_custom_call.1} parent=35 // pred_check_branch
          %334 = sbr.rel (%p332) target = $region40
        $region39: #{tpu_custom_call.1} parent=35 // pred_region
          %335 = dma.done %s328, 128
        $region40: #{tpu_custom_call.1} parent=35 // pred_fallthru
          _
        %s336 = sand.u32 %s32, 1
        %s337 = scalar_lea.sflag [#allocation7], %s336
        %s338 = sand.u32 %s89, 1
        %s339 = smul.addr %s338, 128
        %s340 = scalar_lea.vmem [#allocation6], %s339
        // Predicated region
        $region41: #{tpu_custom_call.1} parent=35 // pred_check
          %p341 = pneg %p102
        $region42: #{tpu_custom_call.1} parent=35 // pred_check_branch
          %343 = sbr.rel (%p341) target = $region44
        $region43: #{tpu_custom_call.1} parent=35 // pred_region
          %344 = dma.done %s337, 2048
        $region44: #{tpu_custom_call.1} parent=35 // pred_fallthru
          _
        %s345 = sand.u32 %s32, 1
        %s346 = scalar_lea.sflag [#allocation7], %s345
        %s347 = sand.u32 %s117, 1
        %s348 = smul.addr %s347, 128
        %s349 = scalar_lea.vmem [#allocation8], %s348
        // Predicated region
        $region45: #{tpu_custom_call.1} parent=35 // pred_check
          %p350 = pneg %p130
        $region46: #{tpu_custom_call.1} parent=35 // pred_check_branch
          %352 = sbr.rel (%p350) target = $region48
        $region47: #{tpu_custom_call.1} parent=35 // pred_region
          %353 = dma.done %s346, 2048
        $region48: #{tpu_custom_call.1} parent=35 // pred_fallthru
          _
        %s354 = sand.u32 %s145, 1
        %s355 = scalar_lea.sflag [#allocation10], %s354
        %s356 = sand.u32 %s145, 1
        %s357 = smul.addr %s356, 128
        %s358 = scalar_lea.vmem [#allocation9], %s357
        // Predicated region
        $region49: #{tpu_custom_call.1} parent=35 // pred_check
          %p359 = pneg %p158
        $region50: #{tpu_custom_call.1} parent=35 // pred_check_branch
          %361 = sbr.rel (%p359) target = $region52
        $region51: #{tpu_custom_call.1} parent=35 // pred_region
          %362 = dma.done %s355, 2048
        $region52: #{tpu_custom_call.1} parent=35 // pred_fallthru
          _
        %s363 = sand.u32 %s61, 1
        %s364 = scalar_lea.sflag [#allocation4], %s363
        %s365 = sand.u32 %s61, 1
        %s366 = smul.addr %s365, 8
        %s367 = scalar_lea.vmem [#allocation3], %s366
        %p368 = pneg %p74
        %p369 = pneg %p71
        %s370 = sand.u32 %s32, 1
        %s371 = scalar_lea.sflag [#allocation7], %s370
        %s372 = sand.u32 %s89, 1
        %s373 = smul.addr %s372, 128
        %s374 = scalar_lea.vmem [#allocation6], %s373
        %p375 = pneg %p102
        %p376 = pneg %p99
        %s377 = sand.u32 %s32, 1
        %s378 = scalar_lea.sflag [#allocation7], %s377
        %s379 = sand.u32 %s117, 1
        %s380 = smul.addr %s379, 128
        %s381 = scalar_lea.vmem [#allocation8], %s380
        %p382 = pneg %p130
        %p383 = pneg %p127
        %s384 = sand.u32 %s145, 1
        %s385 = scalar_lea.sflag [#allocation10], %s384
        %s386 = sand.u32 %s145, 1
        %s387 = smul.addr %s386, 128
        %s388 = scalar_lea.vmem [#allocation9], %s387
        %p389 = pneg %p158
        %p390 = pneg %p155
        %p391 = pneg %p186
        %p392 = pneg %p183
        %s393 = sand.u32 %s173, 1
        %s394 = scalar_lea.sflag [#allocation5], %s393
        %s395 = sand.u32 %s173, 1
        %s396 = smul.addr %s395, 8
        %s397 = scalar_lea.vmem [#allocation11], %s396
        %p398 = pneg %p212
        %p399 = pneg %p209
        %s400 = sand.u32 %s199, 1
        %s401 = scalar_lea.sflag [#allocation13], %s400
        %s402 = sand.u32 %s199, 1
        %s403 = scalar_lea.vmem [#allocation12], %s402
        %s404 = smul.u32 16, %s39
        %s405 = smul.u32 16, %s39
        %s406 = smul.u32 16, %s39
        %p407 = scmp.eq.s32.totalorder %s39, 0
        // Predicated region
        $region53: #{tpu_custom_call.1} parent=35 // pred_check
          %p408 = pneg %p407
        $region54: #{tpu_custom_call.1} parent=35 // pred_check_branch
          %410 = sbr.rel (%p408) target = $region56
        $region55: #{tpu_custom_call.1} parent=35 // pred_region
          %411 = vst [vmem:[#allocation2] sm:$0xff] 0.0
        $region56: #{tpu_custom_call.1} parent=35 // pred_fallthru
          _
        %p412 = scmp.eq.s32.totalorder %s38, 0
        %p413 = pnand %p412, %p407
        %p414 = pneg %p413
        // Predicated region
        $region57: #{tpu_custom_call.1} parent=35 // pred_check
          _
        $region58: #{tpu_custom_call.1} parent=35 // pred_check_branch
          %416 = sbr.rel (%p413) target = $region60
        $region59: #{tpu_custom_call.1} parent=35 // pred_region
          %417 = vst [vmem:[%s403] sm:$0x1] 0.0
        $region60: #{tpu_custom_call.1} parent=35 // pred_fallthru
          _
        %v418 = vld [vmem:[%s340] sm:$0xff]
        %v419 = vld [vmem:[%s340 + $0x8] sm:$0xff]
        %v420 = vld [vmem:[%s340 + $0x10] sm:$0xff]
        %v421 = vld [vmem:[%s340 + $0x18] sm:$0xff]
        %v422 = vld [vmem:[%s340 + $0x20] sm:$0xff]
        %v423 = vld [vmem:[%s340 + $0x28] sm:$0xff]
        %v424 = vld [vmem:[%s340 + $0x30] sm:$0xff]
        %v425 = vld [vmem:[%s340 + $0x38] sm:$0xff]
        %v426 = vld [vmem:[%s340 + $0x40] sm:$0xff]
        %v427 = vld [vmem:[%s340 + $0x48] sm:$0xff]
        %v428 = vld [vmem:[%s340 + $0x50] sm:$0xff]
        %v429 = vld [vmem:[%s340 + $0x58] sm:$0xff]
        %v430 = vld [vmem:[%s340 + $0x60] sm:$0xff]
        %v431 = vld [vmem:[%s340 + $0x68] sm:$0xff]
        %v432 = vld [vmem:[%s340 + $0x70] sm:$0xff]
        %v433 = vld [vmem:[%s340 + $0x78] sm:$0xff]
        %v434 = vld [vmem:[%s349] sm:$0xff]
        %v435 = vld [vmem:[%s349 + $0x8] sm:$0xff]
        %v436 = vld [vmem:[%s349 + $0x10] sm:$0xff]
        %v437 = vld [vmem:[%s349 + $0x18] sm:$0xff]
        %v438 = vld [vmem:[%s349 + $0x20] sm:$0xff]
        %v439 = vld [vmem:[%s349 + $0x28] sm:$0xff]
        %v440 = vld [vmem:[%s349 + $0x30] sm:$0xff]
        %v441 = vld [vmem:[%s349 + $0x38] sm:$0xff]
        %v442 = vld [vmem:[%s349 + $0x40] sm:$0xff]
        %v443 = vld [vmem:[%s349 + $0x48] sm:$0xff]
        %v444 = vld [vmem:[%s349 + $0x50] sm:$0xff]
        %v445 = vld [vmem:[%s349 + $0x58] sm:$0xff]
        %v446 = vld [vmem:[%s349 + $0x60] sm:$0xff]
        %v447 = vld [vmem:[%s349 + $0x68] sm:$0xff]
        %v448 = vld [vmem:[%s349 + $0x70] sm:$0xff]
        %v449 = vld [vmem:[%s349 + $0x78] sm:$0xff]
        %v450 = vmul.f32 %v434, 1.442695
        %v451 = vpow.pop %v450
        %v452 = vmul.f32 %v435, 1.442695
        %v453 = vpow.pop %v452
        %v454 = vmul.f32 %v436, 1.442695
        %v455 = vpow.pop %v454
        %v456 = vmul.f32 %v437, 1.442695
        %v457 = vpow.pop %v456
        %v458 = vmul.f32 %v438, 1.442695
        %v459 = vpow.pop %v458
        %v460 = vmul.f32 %v439, 1.442695
        %v461 = vpow.pop %v460
        %v462 = vmul.f32 %v440, 1.442695
        %v463 = vpow.pop %v462
        %v464 = vmul.f32 %v441, 1.442695
        %v465 = vpow.pop %v464
        %v466 = vmul.f32 %v442, 1.442695
        %v467 = vpow.pop %v466
        %v468 = vmul.f32 %v443, 1.442695
        %v469 = vpow.pop %v468
        %v470 = vmul.f32 %v444, 1.442695
        %v471 = vpow.pop %v470
        %v472 = vmul.f32 %v445, 1.442695
        %v473 = vpow.pop %v472
        %v474 = vmul.f32 %v446, 1.442695
        %v475 = vpow.pop %v474
        %v476 = vmul.f32 %v447, 1.442695
        %v477 = vpow.pop %v476
        %v478 = vmul.f32 %v448, 1.442695
        %v479 = vpow.pop %v478
        %v480 = vmul.f32 %v449, 1.442695
        %v481 = vpow.pop %v480
        %v482 = vld [vmem:[%s358] sm:$0xff]
        %v483 = vld [vmem:[%s358 + $0x8] sm:$0xff]
        %v484 = vld [vmem:[%s358 + $0x10] sm:$0xff]
        %v485 = vld [vmem:[%s358 + $0x18] sm:$0xff]
        %v486 = vld [vmem:[%s358 + $0x20] sm:$0xff]
        %v487 = vld [vmem:[%s358 + $0x28] sm:$0xff]
        %v488 = vld [vmem:[%s358 + $0x30] sm:$0xff]
        %v489 = vld [vmem:[%s358 + $0x38] sm:$0xff]
        %v490 = vld [vmem:[%s358 + $0x40] sm:$0xff]
        %v491 = vld [vmem:[%s358 + $0x48] sm:$0xff]
        %v492 = vld [vmem:[%s358 + $0x50] sm:$0xff]
        %v493 = vld [vmem:[%s358 + $0x58] sm:$0xff]
        %v494 = vld [vmem:[%s358 + $0x60] sm:$0xff]
        %v495 = vld [vmem:[%s358 + $0x68] sm:$0xff]
        %v496 = vld [vmem:[%s358 + $0x70] sm:$0xff]
        %v497 = vld [vmem:[%s358 + $0x78] sm:$0xff]
        %v498 = vmul.f32 %v451, %v482
        %v499 = vmul.f32 %v453, %v483
        %v500 = vmul.f32 %v455, %v484
        %v501 = vmul.f32 %v457, %v485
        %v502 = vmul.f32 %v459, %v486
        %v503 = vmul.f32 %v461, %v487
        %v504 = vmul.f32 %v463, %v488
        %v505 = vmul.f32 %v465, %v489
        %v506 = vmul.f32 %v467, %v490
        %v507 = vmul.f32 %v469, %v491
        %v508 = vmul.f32 %v471, %v492
        %v509 = vmul.f32 %v473, %v493
        %v510 = vmul.f32 %v475, %v494
        %v511 = vmul.f32 %v477, %v495
        %v512 = vmul.f32 %v479, %v496
        %v513 = vmul.f32 %v481, %v497
        %v514 = vadd.f32 %v418, %v498
        %v515 = vadd.f32 %v419, %v499
        %v516 = vadd.f32 %v420, %v500
        %v517 = vadd.f32 %v421, %v501
        %v518 = vadd.f32 %v422, %v502
        %v519 = vadd.f32 %v423, %v503
        %v520 = vadd.f32 %v424, %v504
        %v521 = vadd.f32 %v425, %v505
        %v522 = vadd.f32 %v426, %v506
        %v523 = vadd.f32 %v427, %v507
        %v524 = vadd.f32 %v428, %v508
        %v525 = vadd.f32 %v429, %v509
        %v526 = vadd.f32 %v430, %v510
        %v527 = vadd.f32 %v431, %v511
        %v528 = vadd.f32 %v432, %v512
        %v529 = vadd.f32 %v433, %v513
        %v530 = vld [vmem:[#allocation2] sm:$0xff]
        %v531 = vld [vmem:[%s331] sm:$0xff]
        %532 = vmatprep.subr.mxu0 0.0
        %533 = vmatpush1.msra.mxu0 %v529
        %534 = vmatprep.subr.mxu0 0.0
        %535 = vmatpush1.msra.mxu0 %v528
        %536 = vmatprep.subr.mxu0 0.0
        %537 = vmatpush1.msra.mxu0 %v527
        %538 = vmatprep.subr.mxu0 0.0
        %539 = vmatpush1.msra.mxu0 %v526
        %540 = vmatprep.subr.mxu0 0.0
        %541 = vmatpush1.msra.mxu0 %v525
        %542 = vmatprep.subr.mxu0 0.0
        %543 = vmatpush1.msra.mxu0 %v524
        %544 = vmatprep.subr.mxu0 0.0
        %545 = vmatpush1.msra.mxu0 %v523
        %546 = vmatprep.subr.mxu0 0.0
        %547 = vmatpush1.msra.mxu0 %v522
        %548 = vmatprep.subr.mxu0 0.0
        %549 = vmatpush1.msra.mxu0 %v521
        %550 = vmatprep.subr.mxu0 0.0
        %551 = vmatpush1.msra.mxu0 %v520
        %552 = vmatprep.subr.mxu0 0.0
        %553 = vmatpush1.msra.mxu0 %v519
        %554 = vmatprep.subr.mxu0 0.0
        %555 = vmatpush1.msra.mxu0 %v518
        %556 = vmatprep.subr.mxu0 0.0
        %557 = vmatpush1.msra.mxu0 %v517
        %558 = vmatprep.subr.mxu0 0.0
        %559 = vmatpush1.msra.mxu0 %v516
        %560 = vmatprep.subr.mxu0 0.0
        %561 = vmatpush1.msra.mxu0 %v515
        %562 = vmatprep.subr.mxu0 0.0
        %563 = vmatpush1.msra.mxu0 %v514
        %564 = vmatprep.subr.mxu0 0.0
        %565 = vmatpush2.msra.mxu0 0.0
        %566 = vmatprep.subr.mxu0 0.0
        %567 = vmatpush2.msra.mxu0 0.0
        %568 = vmatprep.subr.mxu0 0.0
        %569 = vmatpush2.msra.mxu0 0.0
        %570 = vmatprep.subr.mxu0 0.0
        %571 = vmatpush2.msra.mxu0 0.0
        %572 = vmatprep.subr.mxu0 0.0
        %573 = vmatpush2.msra.mxu0 0.0
        %574 = vmatprep.subr.mxu0 0.0
        %575 = vmatpush2.msra.mxu0 0.0
        %576 = vmatprep.subr.mxu0 0.0
        %577 = vmatpush2.msra.mxu0 0.0
        %578 = vmatprep.subr.mxu0 0.0
        %579 = vmatpush2.msra.mxu0 0.0
        %580 = vmatprep.subr.mxu0 0.0
        %581 = vmatpush2.msra.mxu0 0.0
        %582 = vmatprep.subr.mxu0 0.0
        %583 = vmatpush2.msra.mxu0 0.0
        %584 = vmatprep.subr.mxu0 0.0
        %585 = vmatpush2.msra.mxu0 0.0
        %586 = vmatprep.subr.mxu0 0.0
        %587 = vmatpush2.msra.mxu0 0.0
        %588 = vmatprep.subr.mxu0 0.0
        %589 = vmatpush2.msra.mxu0 0.0
        %590 = vmatprep.subr.mxu0 0.0
        %591 = vmatpush2.msra.mxu0 0.0
        %592 = vmatprep.subr.mxu0 0.0
        %593 = vmatpush2.msra.mxu0 0.0
        %594 = vmatprep.subr.mxu0 0.0
        %595 = vmatpush2.msra.mxu0 0.0
        %596 = vmatprep.mubr.f32.mxu0 0.0
        %597 = vmatmul.mubr.f32.gmra.mxu0 %v531
        %v598 = vpop.f32.mrf.mxu0
        %v599 = vadd.f32 0.0, %v598
        %v600 = vpop.f32.mrf.mxu0
        %601 = vdwg.mxu0
        %v602 = vadd.f32 %v530, %v599
        %603 = vst [vmem:[#allocation2] sm:$0xff] %v602
        // Predicated region
        $region61: #{tpu_custom_call.1} parent=35 // pred_check
          %p604 = pneg %p412
        $region62: #{tpu_custom_call.1} parent=35 // pred_check_branch
          %606 = sbr.rel (%p604) target = $region64
        $region63: #{tpu_custom_call.1} parent=35 // pred_region
          %v607 = vsub.f32 -3.4957323, %v434
          %v608 = vsub.f32 -3.4957323, %v435
          %v609 = vsub.f32 -3.4957323, %v436
          %v610 = vsub.f32 -3.4957323, %v437
          %v611 = vsub.f32 -3.4957323, %v438
          %v612 = vsub.f32 -3.4957323, %v439
          %v613 = vsub.f32 -3.4957323, %v440
          %v614 = vsub.f32 -3.4957323, %v441
          %v615 = vsub.f32 -3.4957323, %v442
          %v616 = vsub.f32 -3.4957323, %v443
          %v617 = vsub.f32 -3.4957323, %v444
          %v618 = vsub.f32 -3.4957323, %v445
          %v619 = vsub.f32 -3.4957323, %v446
          %v620 = vsub.f32 -3.4957323, %v447
          %v621 = vsub.f32 -3.4957323, %v448
          %v622 = vsub.f32 -3.4957323, %v449
          %v623 = vmul.f32 %v451, %v451
          %v624 = vmul.f32 %v453, %v453
          %v625 = vmul.f32 %v455, %v455
          %v626 = vmul.f32 %v457, %v457
          %v627 = vmul.f32 %v459, %v459
          %v628 = vmul.f32 %v461, %v461
          %v629 = vmul.f32 %v463, %v463
          %v630 = vmul.f32 %v465, %v465
          %v631 = vmul.f32 %v467, %v467
          %v632 = vmul.f32 %v469, %v469
          %v633 = vmul.f32 %v471, %v471
          %v634 = vmul.f32 %v473, %v473
          %v635 = vmul.f32 %v475, %v475
          %v636 = vmul.f32 %v477, %v477
          %v637 = vmul.f32 %v479, %v479
          %v638 = vmul.f32 %v481, %v481
          %v639 = vmul.f32 %v418, %v418
          %v640 = vmul.f32 %v419, %v419
          %v641 = vmul.f32 %v420, %v420
          %v642 = vmul.f32 %v421, %v421
          %v643 = vmul.f32 %v422, %v422
          %v644 = vmul.f32 %v423, %v423
          %v645 = vmul.f32 %v424, %v424
          %v646 = vmul.f32 %v425, %v425
          %v647 = vmul.f32 %v426, %v426
          %v648 = vmul.f32 %v427, %v427
          %v649 = vmul.f32 %v428, %v428
          %v650 = vmul.f32 %v429, %v429
          %v651 = vmul.f32 %v430, %v430
          %v652 = vmul.f32 %v431, %v431
          %v653 = vmul.f32 %v432, %v432
          %v654 = vmul.f32 %v433, %v433
          %v655 = vadd.f32 %v623, %v639
          %v656 = vadd.f32 %v624, %v640
          %v657 = vadd.f32 %v625, %v641
          %v658 = vadd.f32 %v626, %v642
          %v659 = vadd.f32 %v627, %v643
          %v660 = vadd.f32 %v628, %v644
          %v661 = vadd.f32 %v629, %v645
          %v662 = vadd.f32 %v630, %v646
          %v663 = vadd.f32 %v631, %v647
          %v664 = vadd.f32 %v632, %v648
          %v665 = vadd.f32 %v633, %v649
          %v666 = vadd.f32 %v634, %v650
          %v667 = vadd.f32 %v635, %v651
          %v668 = vadd.f32 %v636, %v652
          %v669 = vadd.f32 %v637, %v653
          %v670 = vadd.f32 %v638, %v654
          %v671 = vmul.f32 %v655, 200.0
          %v672 = vmul.f32 %v656, 200.0
          %v673 = vmul.f32 %v657, 200.0
          %v674 = vmul.f32 %v658, 200.0
          %v675 = vmul.f32 %v659, 200.0
          %v676 = vmul.f32 %v660, 200.0
          %v677 = vmul.f32 %v661, 200.0
          %v678 = vmul.f32 %v662, 200.0
          %v679 = vmul.f32 %v663, 200.0
          %v680 = vmul.f32 %v664, 200.0
          %v681 = vmul.f32 %v665, 200.0
          %v682 = vmul.f32 %v666, 200.0
          %v683 = vmul.f32 %v667, 200.0
          %v684 = vmul.f32 %v668, 200.0
          %v685 = vmul.f32 %v669, 200.0
          %v686 = vmul.f32 %v670, 200.0
          %v687 = vadd.f32 %v607, %v671
          %v688 = vadd.f32 %v608, %v672
          %v689 = vadd.f32 %v609, %v673
          %v690 = vadd.f32 %v610, %v674
          %v691 = vadd.f32 %v611, %v675
          %v692 = vadd.f32 %v612, %v676
          %v693 = vadd.f32 %v613, %v677
          %v694 = vadd.f32 %v614, %v678
          %v695 = vadd.f32 %v615, %v679
          %v696 = vadd.f32 %v616, %v680
          %v697 = vadd.f32 %v617, %v681
          %v698 = vadd.f32 %v618, %v682
          %v699 = vadd.f32 %v619, %v683
          %v700 = vadd.f32 %v620, %v684
          %v701 = vadd.f32 %v621, %v685
          %v702 = vadd.f32 %v622, %v686
          %v703 = vadd.f32 %v687, %v688
          %v704 = vadd.f32 %v703, %v689
          %v705 = vadd.f32 %v704, %v690
          %v706 = vadd.f32 %v705, %v691
          %v707 = vadd.f32 %v706, %v692
          %v708 = vadd.f32 %v707, %v693
          %v709 = vadd.f32 %v708, %v694
          %v710 = vadd.f32 %v709, %v695
          %v711 = vadd.f32 %v710, %v696
          %v712 = vadd.f32 %v711, %v697
          %v713 = vadd.f32 %v712, %v698
          %v714 = vadd.f32 %v713, %v699
          %v715 = vadd.f32 %v714, %v700
          %v716 = vadd.f32 %v715, %v701
          %v717 = vadd.f32 %v716, %v702
          %v718 = vrot.slane %v717, 4
          %v719 = vadd.f32 %v717, %v718
          %v720 = vrot.slane %v719, 2
          %v721 = vadd.f32 %v719, %v720
          %v722 = vrot.slane %v721, 1
          %v723 = vadd.f32 %v721, %v722
          %v724 = vld [vmem:[%s403] sm:$0x1]
          %v725 = vadd.f32 %v724, %v723
          %726 = vst [vmem:[%s403] sm:$0x1] %v725
        $region64: #{tpu_custom_call.1} parent=35 // pred_fallthru
          _
        %p727 = scmp.eq.s32.totalorder %s39, 2
        // Predicated region
        $region65: #{tpu_custom_call.1} parent=35 // pred_check
          %p728 = pneg %p727
        $region66: #{tpu_custom_call.1} parent=35 // pred_check_branch
          %730 = sbr.rel (%p728) target = $region68
        $region67: #{tpu_custom_call.1} parent=35 // pred_region
          %v731 = vld [vmem:[#allocation2] sm:$0xff]
          %732 = vst [vmem:[%s397] sm:$0xff] %v731
        $region68: #{tpu_custom_call.1} parent=35 // pred_fallthru
          _
        %s733 = sand.u32 %s173, 1
        %s734 = scalar_lea.sflag [#allocation5], %s733
        %s735 = sand.u32 %s173, 1
        %s736 = smul.addr %s735, 8
        %s737 = scalar_lea.vmem [#allocation11], %s736
        %s738 = sand.u32 %s199, 1
        %s739 = scalar_lea.sflag [#allocation13], %s738
        %s740 = sand.u32 %s199, 1
        %s741 = scalar_lea.vmem [#allocation12], %s740
        // Predicated region
        $region69: #{tpu_custom_call.1} parent=35 // pred_check
          %p742 = pneg %p183
        $region70: #{tpu_custom_call.1} parent=35 // pred_check_branch
          %744 = sbr.rel (%p742) target = $region72
        $region71: #{tpu_custom_call.1} parent=35 // pred_region
          %s746 = ssub.s32 128, 128
          %747 = vsyncadd %s734, %s746
          %s748 = smul.addr %s38, 2
          %s749 = sadd.s32 %s37, %s748
          %s750 = smul.addr %s749, 128
          %s751 = scalar_lea.hbm %s4, %s750
          %s753 = sshll.u32 %s737, 4
          %s754 = int_to_ptr.vmem [resolvable:$true] %s753
          %756 = dma.vmem_to_hbm [thread:$0]  %s754, 128, %s751, %s734
        $region72: #{tpu_custom_call.1} parent=35 // pred_fallthru
          _
        // Predicated region
        $region73: #{tpu_custom_call.1} parent=35 // pred_check
          %p757 = pneg %p209
        $region74: #{tpu_custom_call.1} parent=35 // pred_check_branch
          %759 = sbr.rel (%p757) target = $region76
        $region75: #{tpu_custom_call.1} parent=35 // pred_region
          %s761 = ssub.s32 16, 16
          %762 = vsyncadd %s739, %s761
          %s763 = smul.addr %s37, 16
          %s764 = scalar_lea.hbm %s5, %s763
          %s766 = sshll.u32 %s741, 4
          %s767 = int_to_ptr.vmem [resolvable:$true] %s766
          %769 = dma.vmem_to_hbm [thread:$0]  %s767, 16, %s764, %s739
        $region76: #{tpu_custom_call.1} parent=35 // pred_fallthru
          _
      $region36: #{tpu_custom_call.1} parent=5 // pred_fallthru
        _
      %p770 = scmp.le.s32.totalorder 2, %s27
      // Predicated region
      $region77: #{tpu_custom_call.1} parent=5 // pred_check
        %p771 = pneg %p770
      $region78: #{tpu_custom_call.1} parent=5 // pred_check_branch
        %773 = sbr.rel (%p771) target = $region80
      $region79: #{tpu_custom_call.1} parent=5 // pred_region
        %s774 = ssub.s32 %s27, 2
        // Predicated region
        $region81: #{tpu_custom_call.1} parent=79 // pred_check
          %p775 = pneg %p189
        $region82: #{tpu_custom_call.1} parent=79 // pred_check_branch
          %777 = sbr.rel (%p775) target = $region84
        $region83: #{tpu_custom_call.1} parent=79 // pred_region
          %s778 = sand.u32 %s174, 1
          %s779 = scalar_lea.sflag [#allocation5], %s778
          %s780 = sand.u32 %s174, 1
          %s781 = smul.addr %s780, 8
          %s782 = scalar_lea.vmem [#allocation11], %s781
          %783 = dma.done %s779, 128
        $region84: #{tpu_custom_call.1} parent=79 // pred_fallthru
          _
        // Predicated region
        $region85: #{tpu_custom_call.1} parent=79 // pred_check
          %p784 = pneg %p215
        $region86: #{tpu_custom_call.1} parent=79 // pred_check_branch
          %786 = sbr.rel (%p784) target = $region88
        $region87: #{tpu_custom_call.1} parent=79 // pred_region
          %s787 = sand.u32 %s200, 1
          %s788 = scalar_lea.sflag [#allocation13], %s787
          %s789 = sand.u32 %s200, 1
          %s790 = scalar_lea.vmem [#allocation12], %s789
          %791 = dma.done %s788, 16
        $region88: #{tpu_custom_call.1} parent=79 // pred_fallthru
          _
      $region80: #{tpu_custom_call.1} parent=5 // pred_fallthru
        _
    $region6: #{tpu_custom_call.1} parent=1 // loop_footer
      %s31 = sadd.s32 1, %s27
    $region7: #{tpu_custom_call.1} parent=1 // loop_footer_branch
      %26 = sbr.rel target = $region3
    $region8: #{tpu_custom_call.1} parent=1 // loop_exit
      _
    %792 = vsyncpa [#allocation4], 1
    %s793 = scalar_lea.sflag [#allocation4], 1
    %794 = vsyncpa %s793, 1
    %795 = vsyncpa [#allocation7], 1
    %s796 = scalar_lea.sflag [#allocation7], 1
    %797 = vsyncpa %s796, 1
    %798 = vsyncpa [#allocation10], 1
    %s799 = scalar_lea.sflag [#allocation10], 1
    %800 = vsyncpa %s799, 1
    %801 = vsyncpa [#allocation5], 1
    %s802 = scalar_lea.sflag [#allocation5], 1
    %803 = vsyncpa %s802, 1
    %804 = vsyncpa [#allocation13], 1
    %s805 = scalar_lea.sflag [#allocation13], 1
    %806 = vsyncpa %s805, 1

</llo_original>
